<compile_context>
chip_gen: v5e
topology: v5e:2x2
jax: 0.10.0
libtpu: 0.0.40
codegen_flags: <defaults>
</compile_context>

<pallas_src>
import jax
import jax.numpy as jnp
from jax.experimental import pallas as pl
from jax.experimental.pallas import tpu as pltpu

# ---- vocabulary construction (mirrors the PyTorch script) -------------------
embedding_size = 2
sentences = ['i like tiger', 'i like lion', 'i like animal', 'tiger lion animal',
             'orange lion tiger like', 'tiger salmon cereal like',
             'tiger lion eyes like', 'i like orange', 'orange i hate',
             'orange i movie', 'book music like', 'lion tiger hate',
             'tiger lion like']
word_sequence = ' '.join(sentences).split()
word_list = sorted(set(word_sequence))  # sorted for determinism
voc_size = len(word_list)               # 13

B_TILE = 8  # batch rows per grid step (8 sublanes -> aligned output block)


# ---- Pallas kernel -----------------------------------------------------------
def word2vec_kernel(idx_ref, w_ref, v_ref, out_ref):
    """Forward pass for one-hot inputs, MXU-free.

    idx_ref: (B_pad,) int32 in SMEM (scalar-prefetch) -- target index per row
    w_ref:   (voc, emb) f32 in VMEM                   -- embedding matrix W
    v_ref:   (emb, voc_pad) f32 in VMEM               -- output matrix V (lane-padded)
    out_ref: (B_TILE, voc_pad) f32                    -- logits tile, == (one_hot @ W) @ V
    """
    b_tile = out_ref.shape[0]
    emb = w_ref.shape[1]
    base = pl.program_id(0) * b_tile

    # hidden = W[idx] for the rows of this batch tile: dynamic row slices of the
    # resident W block (no one-hot compare, no cross-lane reductions).
    rows = [w_ref[pl.ds(idx_ref[base + r], 1), :] for r in range(b_tile)]
    hidden = jnp.concatenate(rows, axis=0)                      # (b_tile, emb)

    # output = hidden @ V as a VPU broadcast-FMA (emb == 2: MXU would be idle).
    # Initialise the accumulator with the e = 0 term (no zero fill).
    out = hidden[:, 0:1] * v_ref[0:1, :]                        # (b_tile, voc_pad)
    for e in range(1, emb):
        out = out + hidden[:, e:e + 1] * v_ref[e:e + 1, :]
    out_ref[...] = out


def word2vec_forward(target_idx, W, V):
    """Equivalent to the module forward on X = one_hot(target_idx, voc_size)."""
    batch = target_idx.shape[0]
    voc, emb = W.shape

    voc_pad = pl.cdiv(voc, 128) * 128       # lane-dense logits / V
    b_pad = pl.cdiv(batch, B_TILE) * B_TILE  # whole batch tiles

    idx = target_idx.astype(jnp.int32)
    if b_pad != batch:
        idx = jnp.pad(idx, (0, b_pad - batch))   # padded rows computed, sliced off
    V_pad = jnp.pad(V, ((0, 0), (0, voc_pad - voc))) if voc_pad != voc else V

    grid = (b_pad // B_TILE,)
    out = pl.pallas_call(
        word2vec_kernel,
        out_shape=jax.ShapeDtypeStruct((b_pad, voc_pad), jnp.float32),
        grid_spec=pltpu.PrefetchScalarGridSpec(
            num_scalar_prefetch=1,            # idx -> SMEM before the grid runs
            grid=grid,
            in_specs=[
                # Full-array resident blocks (tiny weights).
                pl.BlockSpec((voc, emb), lambda i, idx_ref: (0, 0)),      # W
                pl.BlockSpec((emb, voc_pad), lambda i, idx_ref: (0, 0)),  # V (padded)
            ],
            out_specs=pl.BlockSpec((B_TILE, voc_pad), lambda i, idx_ref: (i, 0)),
        ),
        compiler_params=pltpu.CompilerParams(
            dimension_semantics=("parallel",)),   # batch tiles shard across TCs on v7x
    )(idx, W, V_pad)

    return out[:batch, :voc]


if __name__ == "__main__":
    key = jax.random.PRNGKey(0)
    k_w, k_v, k_x = jax.random.split(key, 3)

    # Parameters: -2 * rand + 1  => uniform in (-1, 1), matching the PyTorch init.
    W = (-2.0 * jax.random.uniform(k_w, (voc_size, embedding_size),
                                   dtype=jnp.float32) + 1.0)
    V = (-2.0 * jax.random.uniform(k_v, (embedding_size, voc_size),
                                   dtype=jnp.float32) + 1.0)

    # Input: target word indices (the one-hot rows are implied, never built in HBM).
    batch = 8
    target_idx = jax.random.randint(k_x, (batch,), 0, voc_size, dtype=jnp.int32)

    out = word2vec_forward(target_idx, W, V)
    out = jax.block_until_ready(out)

    # Reference check in plain JAX against the original one-hot formulation.
    X = jax.nn.one_hot(target_idx, voc_size, dtype=jnp.float32)
    ref = (X @ W) @ V
    assert out.shape == (batch, voc_size)
    assert jnp.allclose(out, ref, atol=1e-5, rtol=1e-5)

    print("KERNEL_OK")
</pallas_src>

<mosaic_0001>
module attributes {stable_mosaic.version = 11 : i64} {
  func.func @word2vec_kernel(%arg0: i32, %arg1: memref<8xi32, #tpu.memory_space<smem>>, %arg2: memref<13x2xf32, #tpu.memory_space<vmem>>, %arg3: memref<2x128xf32, #tpu.memory_space<vmem>>, %arg4: memref<8x128xf32, #tpu.memory_space<vmem>>) attributes {dimension_semantics = [#tpu.dimension_semantics<parallel>], iteration_bounds = array<i64: 1>, scalar_prefetch = 1 : i64, scratch_operands = 0 : i64, tpu.core_type = #tpu.core_type<tc>, window_params = [{pipeline_mode = #tpu.pipeline_mode<synchronous>, transform_indices = @transform_0, window_bounds = array<i64: 13, 2>}, {pipeline_mode = #tpu.pipeline_mode<synchronous>, transform_indices = @transform_1, window_bounds = array<i64: 2, 128>}, {transform_indices = @transform_2, window_bounds = array<i64: 8, 128>}]} {
    %c8_i32 = arith.constant 8 : i32
    %0 = arith.muli %arg0, %c8_i32 : i32
    %c0_i32 = arith.constant 0 : i32
    %1 = arith.addi %0, %c0_i32 : i32
    %2 = arith.index_cast %1 : i32 to index
    %3 = memref.load %arg1[%2] : memref<8xi32, #tpu.memory_space<smem>>
    %4 = arith.index_cast %3 : i32 to index
    %c0 = arith.constant 0 : index
    %5 = vector.load %arg2[%4, %c0] : memref<13x2xf32, #tpu.memory_space<vmem>>, vector<1x2xf32>
    %c1_i32 = arith.constant 1 : i32
    %6 = arith.addi %0, %c1_i32 : i32
    %7 = arith.index_cast %6 : i32 to index
    %8 = memref.load %arg1[%7] : memref<8xi32, #tpu.memory_space<smem>>
    %9 = arith.index_cast %8 : i32 to index
    %c0_0 = arith.constant 0 : index
    %10 = vector.load %arg2[%9, %c0_0] : memref<13x2xf32, #tpu.memory_space<vmem>>, vector<1x2xf32>
    %c2_i32 = arith.constant 2 : i32
    %11 = arith.addi %0, %c2_i32 : i32
    %12 = arith.index_cast %11 : i32 to index
    %13 = memref.load %arg1[%12] : memref<8xi32, #tpu.memory_space<smem>>
    %14 = arith.index_cast %13 : i32 to index
    %c0_1 = arith.constant 0 : index
    %15 = vector.load %arg2[%14, %c0_1] : memref<13x2xf32, #tpu.memory_space<vmem>>, vector<1x2xf32>
    %c3_i32 = arith.constant 3 : i32
    %16 = arith.addi %0, %c3_i32 : i32
    %17 = arith.index_cast %16 : i32 to index
    %18 = memref.load %arg1[%17] : memref<8xi32, #tpu.memory_space<smem>>
    %19 = arith.index_cast %18 : i32 to index
    %c0_2 = arith.constant 0 : index
    %20 = vector.load %arg2[%19, %c0_2] : memref<13x2xf32, #tpu.memory_space<vmem>>, vector<1x2xf32>
    %c4_i32 = arith.constant 4 : i32
    %21 = arith.addi %0, %c4_i32 : i32
    %22 = arith.index_cast %21 : i32 to index
    %23 = memref.load %arg1[%22] : memref<8xi32, #tpu.memory_space<smem>>
    %24 = arith.index_cast %23 : i32 to index
    %c0_3 = arith.constant 0 : index
    %25 = vector.load %arg2[%24, %c0_3] : memref<13x2xf32, #tpu.memory_space<vmem>>, vector<1x2xf32>
    %c5_i32 = arith.constant 5 : i32
    %26 = arith.addi %0, %c5_i32 : i32
    %27 = arith.index_cast %26 : i32 to index
    %28 = memref.load %arg1[%27] : memref<8xi32, #tpu.memory_space<smem>>
    %29 = arith.index_cast %28 : i32 to index
    %c0_4 = arith.constant 0 : index
    %30 = vector.load %arg2[%29, %c0_4] : memref<13x2xf32, #tpu.memory_space<vmem>>, vector<1x2xf32>
    %c6_i32 = arith.constant 6 : i32
    %31 = arith.addi %0, %c6_i32 : i32
    %32 = arith.index_cast %31 : i32 to index
    %33 = memref.load %arg1[%32] : memref<8xi32, #tpu.memory_space<smem>>
    %34 = arith.index_cast %33 : i32 to index
    %c0_5 = arith.constant 0 : index
    %35 = vector.load %arg2[%34, %c0_5] : memref<13x2xf32, #tpu.memory_space<vmem>>, vector<1x2xf32>
    %c7_i32 = arith.constant 7 : i32
    %36 = arith.addi %0, %c7_i32 : i32
    %37 = arith.index_cast %36 : i32 to index
    %38 = memref.load %arg1[%37] : memref<8xi32, #tpu.memory_space<smem>>
    %39 = arith.index_cast %38 : i32 to index
    %c0_6 = arith.constant 0 : index
    %40 = vector.load %arg2[%39, %c0_6] : memref<13x2xf32, #tpu.memory_space<vmem>>, vector<1x2xf32>
    %41 = tpu.concatenate %5, %10, %15, %20, %25, %30, %35, %40 in 0 : vector<1x2xf32>, vector<1x2xf32>, vector<1x2xf32>, vector<1x2xf32>, vector<1x2xf32>, vector<1x2xf32>, vector<1x2xf32>, vector<1x2xf32> -> vector<8x2xf32>
    %42 = vector.extract_strided_slice %41 {offsets = [0, 0], sizes = [8, 1], strides = [1, 1]} : vector<8x2xf32> to vector<8x1xf32>
    %c0_7 = arith.constant 0 : index
    %c0_8 = arith.constant 0 : index
    %43 = vector.load %arg3[%c0_7, %c0_8] : memref<2x128xf32, #tpu.memory_space<vmem>>, vector<1x128xf32>
    %44 = vector.broadcast %42 : vector<8x1xf32> to vector<8x128xf32>
    %45 = vector.broadcast %43 : vector<1x128xf32> to vector<8x128xf32>
    %46 = arith.mulf %44, %45 : vector<8x128xf32>
    %47 = vector.extract_strided_slice %41 {offsets = [0, 1], sizes = [8, 1], strides = [1, 1]} : vector<8x2xf32> to vector<8x1xf32>
    %c1 = arith.constant 1 : index
    %c0_9 = arith.constant 0 : index
    %48 = vector.load %arg3[%c1, %c0_9] : memref<2x128xf32, #tpu.memory_space<vmem>>, vector<1x128xf32>
    %49 = vector.broadcast %47 : vector<8x1xf32> to vector<8x128xf32>
    %50 = vector.broadcast %48 : vector<1x128xf32> to vector<8x128xf32>
    %51 = arith.mulf %49, %50 : vector<8x128xf32>
    %52 = arith.addf %46, %51 : vector<8x128xf32>
    %c0_10 = arith.constant 0 : index
    %c0_11 = arith.constant 0 : index
    %53 = vector.load %arg4[%c0_10, %c0_11] : memref<8x128xf32, #tpu.memory_space<vmem>>, vector<8x128xf32>
    tpu.vector_store %arg4[%c0_10, %c0_11], %52 {strides = array<i32>} : memref<8x128xf32, #tpu.memory_space<vmem>>, vector<8x128xf32>,
    return
  }
  func.func @transform_0(%arg0: i32, %arg1: memref<8xi32, #tpu.memory_space<smem>>) -> (i32, i32) {
    %c0_i32 = arith.constant 0 : i32
    %c0_i32_0 = arith.constant 0 : i32
    %c0_i32_1 = arith.constant 0 : i32
    return %c0_i32, %c0_i32_0 : i32, i32
  }
  func.func @transform_1(%arg0: i32, %arg1: memref<8xi32, #tpu.memory_space<smem>>) -> (i32, i32) {
    %c0_i32 = arith.constant 0 : i32
    %c0_i32_0 = arith.constant 0 : i32
    %c0_i32_1 = arith.constant 0 : i32
    return %c0_i32, %c0_i32_0 : i32, i32
  }
  func.func @transform_2(%arg0: i32, %arg1: memref<8xi32, #tpu.memory_space<smem>>) -> (i32, i32) {
    %c0_i32 = arith.constant 0 : i32
    %c0_i32_0 = arith.constant 0 : i32
    return %arg0, %c0_i32 : i32, i32
  }
}

</mosaic_0001>

<llo_original>
// kernel: tpu_custom_call.1
$region0: #{tpu_custom_call.1}
  #allocation0 [shape = 'u32[]', space=smem, size = 0x4, offset = 0x4, fixed_abs, tag = 'smem constant byte address 0x4 - core index']
  #allocation1 [shape = 'u32[72,128]{1,0:T(1,128)}', space=vmem, size = 0x9000, scoped, tag = 'internal scratch']
  #allocation2 [shape = 's32[1]{0}', space=sflag, size = 0x4, scoped, tag = 'scoped memory for tpu_custom_call.1']
  #allocation3 [shape = 'u8[512]{0}', space=smem, size = 0x200, scoped, tag = 'prefetched SMEM operand 0']
  %s0 = inlined_call_operand.vmem [shape: s32[8], index: 0, kind: input, shape index: {}]
  %s1 = inlined_call_operand.vmem [shape: f32[13,2], index: 1, kind: input, shape index: {}]
  %s2 = inlined_call_operand.vmem [shape: f32[2,128], index: 2, kind: input, shape index: {}]
  %s3 = inlined_call_operand.hbm [shape: f32[8,128], index: 3, kind: output, shape index: {}]
  %s4 = sld [smem:[#allocation0]]
  $region18: #{tpu_custom_call.1} parent=0
    _
  %s6 = ssub.s32 1, %s4
  %s7 = scalar_select 0, %s6, %s4
  %s9 = sshll.u32 %s0, 4
  %s10 = int_to_ptr.vmem [resolvable:$true] %s9
  %12 = dma.vmem_to_smem %s10, 16, [#allocation3], [#allocation2]
  %14 = dma.done [#allocation2], 16
  %15 = sfence
  $region1: #{tpu_custom_call.1} parent=0
    #allocation4 [shape = 'u8[4096]{0}', space=vmem, size = 0x1000, scoped, tag = 'output window, operand 0, single buffered']
    #allocation5 [shape = 's32[1]{0}', space=sflag, size = 0x4, scoped, tag = 'scoped memory for tpu_custom_call.1']
    %16 = vsyncpa [#allocation5], 0
    // Predicated region
    $region2: #{tpu_custom_call.1} parent=1 // pred_check
      _
    $region3: #{tpu_custom_call.1} parent=1 // pred_check_branch
      %18 = sbr.rel (0) target = $region5
    $region4: #{tpu_custom_call.1} parent=1 // pred_region
      _
    $region5: #{tpu_custom_call.1} parent=1 // pred_fallthru
      _
    // Predicated region
    $region6: #{tpu_custom_call.1} parent=1 // pred_check
      _
    $region7: #{tpu_custom_call.1} parent=1 // pred_check_branch
      %20 = sbr.rel (0) target = $region9
    $region8: #{tpu_custom_call.1} parent=1 // pred_region
      _
    $region9: #{tpu_custom_call.1} parent=1 // pred_fallthru
      _
    %s21 = smul.u32 0, 8
    %s22 = sld [smem:[#allocation3 + %s21]]
    %s23 = scalar_lea.vmem %s1, %s22
    %v24 = vld [vmem:[%s23] sm:$0x1]
    %s25 = sadd.s32 %s21, 1
    %s26 = sld [smem:[#allocation3 + %s25]]
    %s27 = scalar_lea.vmem %s1, %s26
    %v28 = vld [vmem:[%s27] sm:$0x1]
    %s29 = sadd.s32 %s21, 2
    %s30 = sld [smem:[#allocation3 + %s29]]
    %s31 = scalar_lea.vmem %s1, %s30
    %v32 = vld [vmem:[%s31] sm:$0x1]
    %s33 = sadd.s32 %s21, 3
    %s34 = sld [smem:[#allocation3 + %s33]]
    %s35 = scalar_lea.vmem %s1, %s34
    %v36 = vld [vmem:[%s35] sm:$0x1]
    %s37 = sadd.s32 %s21, 4
    %s38 = sld [smem:[#allocation3 + %s37]]
    %s39 = scalar_lea.vmem %s1, %s38
    %v40 = vld [vmem:[%s39] sm:$0x1]
    %s41 = sadd.s32 %s21, 5
    %s42 = sld [smem:[#allocation3 + %s41]]
    %s43 = scalar_lea.vmem %s1, %s42
    %v44 = vld [vmem:[%s43] sm:$0x1]
    %s45 = sadd.s32 %s21, 6
    %s46 = sld [smem:[#allocation3 + %s45]]
    %s47 = scalar_lea.vmem %s1, %s46
    %v48 = vld [vmem:[%s47] sm:$0x1]
    %s49 = sadd.s32 %s21, 7
    %s50 = sld [smem:[#allocation3 + %s49]]
    %s51 = scalar_lea.vmem %s1, %s50
    %v52 = vld [vmem:[%s51] sm:$0x1]
    %v54 = vrot.slane %v28, 7
    %v57 = vrot.slane %v32, 6
    %v60 = vrot.slane %v36, 5
    %v63 = vrot.slane %v40, 4
    %v66 = vrot.slane %v44, 3
    %v69 = vrot.slane %v48, 2
    %v72 = vrot.slane %v52, 1
    %vm74 = vcmask 1040384
    %v75 = vsel %vm74, %v24, %v54
    %vm76 = vcmask 1041408
    %v77 = vsel %vm76, %v75, %v57
    %vm78 = vcmask 1042432
    %v79 = vsel %vm78, %v77, %v60
    %vm80 = vcmask 1043456
    %v81 = vsel %vm80, %v79, %v63
    %vm82 = vcmask 1044480
    %v83 = vsel %vm82, %v81, %v66
    %vm84 = vcmask 1045504
    %v85 = vsel %vm84, %v83, %v69
    %vm86 = vcmask 1046528
    %v87 = vsel %vm86, %v85, %v72
    %v88 = vld [vmem:[%s2] sm:$0x1]
    %90 = vset.pattern.permute.xlu0 0
    %91 = vperm.xlu0 %90, %v87
    %v92 = vpop.permute.xlu0 %91
    %v94 = vperm.slane %v88, 0
    %v95 = vmul.f32 %v92, %v94
    %v96 = vld [vmem:[%s2 + $0x1] sm:$0x1]
    %97 = vset.pattern.permute.xlu0 1
    %98 = vperm.xlu0 %97, %v87
    %v99 = vpop.permute.xlu0 %98
    %v101 = vperm.slane %v96, 0
    %v102 = vmul.f32 %v99, %v101
    %v103 = vadd.f32 %v95, %v102
    %104 = vst [vmem:[#allocation4] sm:$0xff] %v103
    // Predicated region
    $region10: #{tpu_custom_call.1} parent=1 // pred_check
      _
    $region11: #{tpu_custom_call.1} parent=1 // pred_check_branch
      %106 = sbr.rel (0) target = $region13
    $region12: #{tpu_custom_call.1} parent=1 // pred_region
      %108 = vsyncadd [#allocation5], 0
      %s110 = sshll.u32 [#allocation4], 4
      %s111 = int_to_ptr.vmem [resolvable:$true] %s110
      %s112 = sshll.u32 %s3, 4
      %s113 = int_to_ptr.hbm [resolvable:$true] %s112
      %115 = dma.vmem_to_hbm [thread:$0]  %s111, 128, %s113, [#allocation5]
    $region13: #{tpu_custom_call.1} parent=1 // pred_fallthru
      _
    // Predicated region
    $region14: #{tpu_custom_call.1} parent=1 // pred_check
      _
    $region15: #{tpu_custom_call.1} parent=1 // pred_check_branch
      %117 = sbr.rel (0) target = $region17
    $region16: #{tpu_custom_call.1} parent=1 // pred_region
      %119 = dma.done [#allocation5], 128
    $region17: #{tpu_custom_call.1} parent=1 // pred_fallthru
      _
    %120 = vsyncpa [#allocation5], 1

</llo_original>
